<compile_context>
chip_gen: v6e
topology: v6e:2x2x1
jax: 0.10.0
libtpu: 0.0.40
codegen_flags: <defaults>
</compile_context>

<pallas_src>
import jax
import jax.numpy as jnp
from jax.experimental import pallas as pl
from jax.experimental.pallas import tpu as pltpu


# ----------------------------------------------------------------------------
# Identity (encoder.maxpool = Identity(), encoder.fc = Identity())
# ----------------------------------------------------------------------------
def identity(x: jax.Array) -> jax.Array:
    """Identity.forward(x) -> x.  Zero bytes moved; XLA forwards the buffer."""
    return x


def _copy_kernel(x_ref, o_ref):
    o_ref[...] = x_ref[...]


# Widest-first lane-dense candidates (all multiples of 128).
_LANE_CANDIDATES = (4096, 2048, 1024, 512, 256, 128)
# 3 MiB blocks: 3 MiB x 2 double-buffers x (in + out) = 12 MiB, comfortably
# under v5e's 16 MiB scoped-VMEM default (leaves headroom for compiler scratch).
_MAX_BLOCK_BYTES = 3 * 1024 * 1024
# Only bother splitting the grid (for v7x's 2 TensorCores) on big copies.
_SPLIT_THRESHOLD_BYTES = 2 * 1024 * 1024


def identity_copy(x: jax.Array) -> jax.Array:
    """Last-resort Pallas identity: a real copy.

    NOTE: even with `input_output_aliases={0: 0}` this pays a full HBM
    read+write of x for zero semantic effect -- prefer `identity()` whenever a
    pallas_call is not strictly required.
    """
    total = x.size

    # Flatten to the widest lane-dense 2-D slab available -> long unmasked
    # vld/vst runs.  Non-multiple-of-128 sizes fall back to a single
    # full-array block (correct, but lowers to masked partial stores).
    lane = None
    for cand in _LANE_CANDIDATES:
        if total >= cand and total % cand == 0:
            lane = cand
            break
    if lane is None:
        flat = x.reshape(1, total)
    else:
        flat = x.reshape(total // lane, lane)
    rows, cols = flat.shape

    bytes_per_row = cols * flat.dtype.itemsize
    total_bytes = rows * bytes_per_row
    block_rows = max(1, min(rows, _MAX_BLOCK_BYTES // max(1, bytes_per_row)))

    # v7x megacore: on large copies make sure the 'parallel' grid has >= 2
    # steps so both TensorCores' DMA queues are engaged.
    if total_bytes >= _SPLIT_THRESHOLD_BYTES and block_rows * 2 > rows:
        block_rows = max(8, (((rows + 1) // 2) // 8) * 8)

    if block_rows < rows:
        # Keep the sublane dimension a multiple of 8 when tiling.
        block_rows = max(8, (block_rows // 8) * 8)

    out = pl.pallas_call(
        _copy_kernel,
        out_shape=jax.ShapeDtypeStruct(flat.shape, flat.dtype),
        grid=(pl.cdiv(rows, block_rows),),
        in_specs=[pl.BlockSpec((block_rows, cols), lambda i: (i, 0))],
        out_specs=pl.BlockSpec((block_rows, cols), lambda i: (i, 0)),
        # Safe only because src and dst block indices are identical each step.
        input_output_aliases={0: 0},
        compiler_params=pltpu.CompilerParams(
            dimension_semantics=("parallel",),
        ),
    )(flat)
    return out.reshape(x.shape)


# ----------------------------------------------------------------------------
# ProjectionHead(head_type='nonlinear'):
#   x @ W1 -> ReLU -> @ W2   (both Linear layers have bias=False)
# ----------------------------------------------------------------------------
def _projection_head_kernel(x_ref, w1_ref, w2_ref, o_ref):
    # x: (TB, D_in) bf16, w1: (D_in, D_h) bf16, w2: (D_h, D_out) bf16.
    # bf16 operands hit the native MXU path; accumulate in f32.
    h = jnp.dot(x_ref[...], w1_ref[...], preferred_element_type=jnp.float32)
    # ReLU on the f32 accumulator, then downcast to the second matmul's dtype.
    h = jnp.maximum(h, 0.0).astype(w2_ref.dtype)
    o_ref[...] = jnp.dot(
        h, w2_ref[...], preferred_element_type=jnp.float32
    ).astype(o_ref.dtype)


def _pick_batch_tile(B: int, block_rows: int) -> int:
    """Pick the batch tile: big, multiple of 8 (or == B), preferring B % tb == 0,
    and producing >= 2 grid steps for large batches (v7x 2-TC sharding)."""
    if B <= block_rows:
        tb = B  # full-dim block is always layout-legal
        if B >= 256 and B % 2 == 0 and (B // 2) % 8 == 0:
            tb = B // 2  # guarantee >= 2 grid steps when the batch is big
        return tb
    tb = max(8, (min(block_rows, B) // 8) * 8)
    for cand in range(tb, 7, -8):  # prefer a divisor of B -> no padded rows
        if B % cand == 0:
            return cand
    return tb


def projection_head(x: jax.Array, w1: jax.Array, w2: jax.Array,
                    *, block_rows: int = 1024) -> jax.Array:
    """Fused nonlinear projection head (bf16 MXU matmuls, f32 accumulation).

    x:  (B, D_in)    encoder features (post torch.squeeze)
    w1: (D_in, D_h)  -- nn.Linear weight already transposed to (in, out)
    w2: (D_h, D_out) -- nn.Linear weight already transposed to (in, out)
    """
    B, D_in = x.shape
    D_h = w1.shape[1]
    D_out = w2.shape[1]
    out_dtype = x.dtype

    # bf16 inputs: native MXU throughput, half the weight DMA / VMEM footprint.
    xb = x.astype(jnp.bfloat16)
    w1b = w1.astype(jnp.bfloat16)
    w2b = w2.astype(jnp.bfloat16)

    tb = _pick_batch_tile(B, block_rows)
    grid = (pl.cdiv(B, tb),)

    # Advisory cost for XLA's scheduler (overlap surrounding ops).
    bf16_bytes = jnp.dtype(jnp.bfloat16).itemsize
    out_bytes = jnp.dtype(out_dtype).itemsize
    cost = pl.CostEstimate(
        flops=2 * B * (D_in * D_h + D_h * D_out),
        transcendentals=0,
        bytes_accessed=(B * D_in + D_in * D_h + D_h * D_out) * bf16_bytes
        + B * D_out * out_bytes,
    )

    # VMEM budget: double-buffered x/out tiles + double-buffered resident
    # weights.  Only raise the limit when the default (16/32 MiB scoped) might
    # not be enough (e.g. ResNet50-sized heads).
    needed = 2 * (
        tb * D_in * bf16_bytes
        + D_in * D_h * bf16_bytes
        + D_h * D_out * bf16_bytes
        + tb * D_out * out_bytes
    )
    cp_kwargs = dict(dimension_semantics=("parallel",))
    if needed > 12 * 1024 * 1024:
        cp_kwargs["vmem_limit_bytes"] = int(needed + 8 * 1024 * 1024)

    return pl.pallas_call(
        _projection_head_kernel,
        out_shape=jax.ShapeDtypeStruct((B, D_out), out_dtype),
        grid=grid,
        in_specs=[
            pl.BlockSpec((tb, D_in), lambda i: (i, 0)),     # batch tile
            pl.BlockSpec((D_in, D_h), lambda i: (0, 0)),    # resident weight
            pl.BlockSpec((D_h, D_out), lambda i: (0, 0)),   # resident weight
        ],
        out_specs=pl.BlockSpec((tb, D_out), lambda i: (i, 0)),
        compiler_params=pltpu.CompilerParams(**cp_kwargs),
        cost_estimate=cost,
    )(xb, w1b, w2b)


if __name__ == "__main__":
    key = jax.random.PRNGKey(0)
    k_img, k_feat, k_w1, k_w2 = jax.random.split(key, 4)

    # Small shapes consistent with the module: ResNet18 -> p_in_features=512,
    # nonlinear head 512 -> 256 -> 128, batch 8, 4-channel 16x16 images.
    B, C, H, W = 8, 4, 16, 16
    D_IN, D_HID, D_OUT = 512, 256, 128

    x_img = jax.random.normal(k_img, (B, C, H, W), dtype=jnp.float32)

    # --- Identity (maxpool / fc replacements): zero-copy buffer forward ---
    y_id = identity(x_img)
    assert y_id is x_img

    # --- Last-resort Pallas identity copy (aliased, lane-dense) ---
    y_copy = identity_copy(x_img)
    jax.block_until_ready(y_copy)
    assert y_copy.shape == x_img.shape and y_copy.dtype == x_img.dtype
    assert bool(jnp.all(y_copy == x_img))

    # --- Encoder output features (encoder itself is not translated) ---
    feats = jax.random.normal(k_feat, (B, D_IN), dtype=jnp.float32)

    # Projection-head weights, stored pre-transposed to (in, out) so the kernel
    # runs plain lane-dense matmuls; scaled ~1/sqrt(fan_in) like PyTorch init.
    w1 = jax.random.normal(k_w1, (D_IN, D_HID), dtype=jnp.float32) / jnp.sqrt(
        jnp.float32(D_IN)
    )
    w2 = jax.random.normal(k_w2, (D_HID, D_OUT), dtype=jnp.float32) / jnp.sqrt(
        jnp.float32(D_HID)
    )

    # torch.squeeze(out) on (B, 512) with B > 1 is a no-op.
    xp = projection_head(feats, w1, w2)
    jax.block_until_ready(xp)
    assert xp.shape == (B, D_OUT) and xp.dtype == feats.dtype

    # Reference emulating the kernel's bf16-inputs / f32-accumulation math.
    xb = feats.astype(jnp.bfloat16)
    w1b = w1.astype(jnp.bfloat16)
    w2b = w2.astype(jnp.bfloat16)
    h_ref = jnp.dot(xb, w1b, preferred_element_type=jnp.float32)
    h_ref = jnp.maximum(h_ref, 0.0).astype(jnp.bfloat16)
    ref_bf16 = jnp.dot(h_ref, w2b, preferred_element_type=jnp.float32)
    assert bool(jnp.allclose(xp, ref_bf16, rtol=2e-2, atol=2e-2))

    # Sanity vs full-f32 math (looser tolerance due to bf16 inputs).
    ref_f32 = jnp.maximum(feats @ w1, 0.0) @ w2
    assert bool(jnp.allclose(xp, ref_f32, rtol=6e-2, atol=6e-2))

    print("KERNEL_OK")
</pallas_src>

<mosaic_0001>
module attributes {stable_mosaic.version = 11 : i64} {
  func.func @_copy_kernel(%arg0: i32, %arg1: memref<2x4096xf32, #tpu.memory_space<vmem>>, %arg2: memref<2x4096xf32, #tpu.memory_space<vmem>>) attributes {dimension_semantics = [#tpu.dimension_semantics<parallel>], iteration_bounds = array<i64: 1>, scalar_prefetch = 0 : i64, scratch_operands = 0 : i64, tpu.core_type = #tpu.core_type<tc>, window_params = [{transform_indices = @transform_0, window_bounds = array<i64: 2, 4096>}, {transform_indices = @transform_1, window_bounds = array<i64: 2, 4096>}]} {
    %c0 = arith.constant 0 : index
    %c0_0 = arith.constant 0 : index
    %0 = vector.load %arg1[%c0, %c0_0] : memref<2x4096xf32, #tpu.memory_space<vmem>>, vector<2x4096xf32>
    %c0_1 = arith.constant 0 : index
    %c0_2 = arith.constant 0 : index
    %1 = vector.load %arg2[%c0_1, %c0_2] : memref<2x4096xf32, #tpu.memory_space<vmem>>, vector<2x4096xf32>
    tpu.vector_store %arg2[%c0_1, %c0_2], %0 {strides = array<i32>} : memref<2x4096xf32, #tpu.memory_space<vmem>>, vector<2x4096xf32>,
    return
  }
  func.func @transform_0(%arg0: i32) -> (i32, i32) {
    %c0_i32 = arith.constant 0 : i32
    %c0_i32_0 = arith.constant 0 : i32
    return %arg0, %c0_i32 : i32, i32
  }
  func.func @transform_1(%arg0: i32) -> (i32, i32) {
    %c0_i32 = arith.constant 0 : i32
    %c0_i32_0 = arith.constant 0 : i32
    return %arg0, %c0_i32 : i32, i32
  }
}

</mosaic_0001>

<llo_original>
// kernel: tpu_custom_call.1
$region0: #{tpu_custom_call.1}
  #allocation0 [shape = 'u32[]', space=smem, size = 0x4, offset = 0x4, fixed_abs, tag = 'smem constant byte address 0x4 - core index']
  #allocation1 [shape = 'u32[144,128]{1,0:T(1,128)}', space=vmem, size = 0x12000, scoped, tag = 'internal scratch']
  %s0 = inlined_call_operand.hbm [shape: f32[2,4096], index: 0, kind: input, shape index: {}, may-alias: {0,1}]
  %s1 = inlined_call_operand.hbm [shape: f32[2,4096], index: 1, kind: output, shape index: {}, may-alias: {0,1}]
  %s2 = sld [smem:[#allocation0]]
  $region18: #{tpu_custom_call.1} parent=0
    _
  %s4 = ssub.s32 1, %s2
  %s5 = scalar_select 0, %s4, %s2
  $region1: #{tpu_custom_call.1} parent=0
    #allocation2 [shape = 'u8[32768]{0}', space=vmem, size = 0x8000, scoped, tag = 'input window, operand 0, single buffered']
    #allocation3 [shape = 's32[1]{0}', space=sflag, size = 0x4, scoped, tag = 'scoped memory for tpu_custom_call.1']
    #allocation4 [shape = 's32[1]{0}', space=sflag, size = 0x4, scoped, tag = 'scoped memory for tpu_custom_call.1']
    #allocation5 [shape = 'u8[32768]{0}', space=vmem, size = 0x8000, scoped, tag = 'output window, operand 0, single buffered']
    %6 = vsyncpa [#allocation3], 0
    %7 = vsyncpa [#allocation4], 0
    // Predicated region
    $region2: #{tpu_custom_call.1} parent=1 // pred_check
      _
    $region3: #{tpu_custom_call.1} parent=1 // pred_check_branch
      %9 = sbr.rel (0) target = $region5
    $region4: #{tpu_custom_call.1} parent=1 // pred_region
      %s11 = ssub.s32 1024, 1024
      %12 = vsyncadd [#allocation3], %s11
      %s14 = sshll.u32 [#allocation2], 4
      %s15 = int_to_ptr.vmem [resolvable:$true] %s14
      %17 = dma.hbm_to_vmem [thread:$0]  %s0, 1024, %s15, [#allocation3]
    $region5: #{tpu_custom_call.1} parent=1 // pred_fallthru
      _
    // Predicated region
    $region6: #{tpu_custom_call.1} parent=1 // pred_check
      _
    $region7: #{tpu_custom_call.1} parent=1 // pred_check_branch
      %19 = sbr.rel (0) target = $region9
    $region8: #{tpu_custom_call.1} parent=1 // pred_region
      %20 = dma.done [#allocation3], 1024
    $region9: #{tpu_custom_call.1} parent=1 // pred_fallthru
      _
    %v21 = vld [vmem:[#allocation2] sm:$0xff]
    %v22 = vld [vmem:[#allocation2 + $0x8] sm:$0xff]
    %v23 = vld [vmem:[#allocation2 + $0x10] sm:$0xff]
    %v24 = vld [vmem:[#allocation2 + $0x18] sm:$0xff]
    %v25 = vld [vmem:[#allocation2 + $0x20] sm:$0xff]
    %v26 = vld [vmem:[#allocation2 + $0x28] sm:$0xff]
    %v27 = vld [vmem:[#allocation2 + $0x30] sm:$0xff]
    %v28 = vld [vmem:[#allocation2 + $0x38] sm:$0xff]
    %29 = vst [vmem:[#allocation5] sm:$0xff] %v21
    %30 = vst [vmem:[#allocation5 + $0x8] sm:$0xff] %v22
    %31 = vst [vmem:[#allocation5 + $0x10] sm:$0xff] %v23
    %32 = vst [vmem:[#allocation5 + $0x18] sm:$0xff] %v24
    %33 = vst [vmem:[#allocation5 + $0x20] sm:$0xff] %v25
    %34 = vst [vmem:[#allocation5 + $0x28] sm:$0xff] %v26
    %35 = vst [vmem:[#allocation5 + $0x30] sm:$0xff] %v27
    %36 = vst [vmem:[#allocation5 + $0x38] sm:$0xff] %v28
    // Predicated region
    $region10: #{tpu_custom_call.1} parent=1 // pred_check
      _
    $region11: #{tpu_custom_call.1} parent=1 // pred_check_branch
      %38 = sbr.rel (0) target = $region13
    $region12: #{tpu_custom_call.1} parent=1 // pred_region
      %s40 = ssub.s32 1024, 1024
      %41 = vsyncadd [#allocation4], %s40
      %s43 = sshll.u32 [#allocation5], 4
      %s44 = int_to_ptr.vmem [resolvable:$true] %s43
      %46 = dma.vmem_to_hbm [thread:$0]  %s44, 1024, %s1, [#allocation4]
    $region13: #{tpu_custom_call.1} parent=1 // pred_fallthru
      _
    // Predicated region
    $region14: #{tpu_custom_call.1} parent=1 // pred_check
      _
    $region15: #{tpu_custom_call.1} parent=1 // pred_check_branch
      %48 = sbr.rel (0) target = $region17
    $region16: #{tpu_custom_call.1} parent=1 // pred_region
      %49 = dma.done [#allocation4], 1024
    $region17: #{tpu_custom_call.1} parent=1 // pred_fallthru
      _
    %50 = vsyncpa [#allocation3], 1
    %51 = vsyncpa [#allocation4], 1

</llo_original>
